<compile_context>
chip_gen: v6e
topology: v6e:2x2x1
jax: 0.10.0
libtpu: 0.0.40
codegen_flags: <defaults>
</compile_context>

<pallas_src>
import functools

import jax
import jax.numpy as jnp
from jax.experimental import pallas as pl
from jax.experimental.pallas import tpu as pltpu


_LANE = 128
_RING = 4                              # max outstanding HBM->HBM DMAs (power of 2)
_DEFAULT_CHUNK_BYTES = 4 * 1024 * 1024  # per-DMA chunk; VMEM footprint is ~0 regardless


def _whole_dma_copy_kernel(x_hbm, o_hbm, sems):
    """Single HBM->HBM DMA of the entire array (any rank / any size)."""
    cp = pltpu.make_async_copy(x_hbm, o_hbm, sems.at[0])
    cp.start()
    cp.wait()


def _chunked_dma_copy_kernel(x_hbm, o_hbm, sems, *, chunk_rows, n_full, rem_rows, ring):
    """Chunked direct HBM->HBM copy of a lane-dense (rows, 128) slab.

    No VMEM staging: each chunk is one DMA whose source and destination both
    live in HBM, with up to `ring` DMAs in flight so multiple DMA engines can
    be engaged.
    """

    def _desc(i, slot):
        start = i * chunk_rows
        return pltpu.make_async_copy(
            x_hbm.at[pl.ds(start, chunk_rows)],
            o_hbm.at[pl.ds(start, chunk_rows)],
            sems.at[slot],
        )

    prologue = min(ring, n_full)

    # Prime the ring (static unroll; chunk indices are compile-time constants).
    for c in range(prologue):
        _desc(c, c).start()

    if n_full > 0:
        @pl.loop(0, n_full)
        def _(i):
            # Retire chunk i, then refill its ring slot with chunk i + prologue.
            _desc(i, i & (ring - 1)).wait()

            @pl.when(i + prologue < n_full)
            def _():
                nxt = i + prologue
                _desc(nxt, nxt & (ring - 1)).start()

    if rem_rows > 0:
        # Statically-sized tail chunk (slot 0 is guaranteed retired by now).
        tail = pltpu.make_async_copy(
            x_hbm.at[pl.ds(n_full * chunk_rows, rem_rows)],
            o_hbm.at[pl.ds(n_full * chunk_rows, rem_rows)],
            sems.at[0],
        )
        tail.start()
        tail.wait()


def _pallas_identity_copy(x: jax.Array, *, chunk_bytes: int = _DEFAULT_CHUNK_BYTES) -> jax.Array:
    """Materializes a copy of `x` via direct HBM->HBM DMAs.

    Returns an array with the same flat contents as `x` (shape may be
    (rows, 128) for lane-aligned sizes, or x.shape otherwise); the caller
    reshapes to the final output shape (metadata-only).
    """
    total = x.size
    if total == 0:
        return x
    itemsize = jnp.dtype(x.dtype).itemsize
    cost = pl.CostEstimate(flops=0, transcendentals=0,
                           bytes_accessed=2 * total * itemsize)

    if total % _LANE == 0:
        rows = total // _LANE
        row_bytes = _LANE * itemsize
        chunk_rows = max(8, (chunk_bytes // row_bytes) // 8 * 8)
        if rows > chunk_rows:
            flat = jnp.reshape(x, (rows, _LANE))  # metadata-only (row-major)
            n_full, rem_rows = divmod(rows, chunk_rows)
            kernel = functools.partial(
                _chunked_dma_copy_kernel,
                chunk_rows=chunk_rows, n_full=n_full, rem_rows=rem_rows, ring=_RING,
            )
            return pl.pallas_call(
                kernel,
                out_shape=jax.ShapeDtypeStruct((rows, _LANE), x.dtype),
                in_specs=[pl.BlockSpec(memory_space=pl.ANY)],
                out_specs=pl.BlockSpec(memory_space=pl.ANY),
                scratch_shapes=[pltpu.SemaphoreType.DMA((_RING,))],
                cost_estimate=cost,
            )(flat)

    # Small arrays, or element counts not divisible by 128: one whole-array DMA
    # (still a real materialized copy — no silent reshape fallback).
    return pl.pallas_call(
        _whole_dma_copy_kernel,
        out_shape=jax.ShapeDtypeStruct(x.shape, x.dtype),
        in_specs=[pl.BlockSpec(memory_space=pl.ANY)],
        out_specs=pl.BlockSpec(memory_space=pl.ANY),
        scratch_shapes=[pltpu.SemaphoreType.DMA((1,))],
        cost_estimate=cost,
    )(x)


def merge_channel(
    inputs: jax.Array,
    channel: int = 1,          # accepted for API parity with the torch module; unused there too
    merge: bool = True,
    use_pallas_copy: bool = False,
    copy_chunk_bytes: int = _DEFAULT_CHUNK_BYTES,
) -> jax.Array:
    """JAX/Pallas equivalent of MergeChannel.forward.

    Production path (default): zero-copy reshape — squeeze/unsqueeze of a
    size-1 dim is metadata-only, so nothing is moved.

    use_pallas_copy=True (debug / fusion anchor only): routes the data through
    a chunked direct HBM->HBM DMA copy kernel; values are identical either way.
    """
    del channel  # unused, mirroring the reference module

    if merge:
        assert inputs.ndim == 4 and inputs.shape[1] == 1, (
            "MergeChannel supports mono channel"
        )
        out_shape = (inputs.shape[0],) + inputs.shape[2:]
    else:
        out_shape = inputs.shape[:1] + (1,) + inputs.shape[1:]

    if not use_pallas_copy:
        # torch.squeeze / torch.unsqueeze on dim 1: pure metadata reshape.
        return jnp.reshape(inputs, out_shape)

    copied = _pallas_identity_copy(inputs, chunk_bytes=copy_chunk_bytes)
    return jnp.reshape(copied, out_shape)


if __name__ == "__main__":
    key = jax.random.PRNGKey(0)

    # NCHW input with mono channel, small shapes.
    B, C, H, W = 2, 1, 16, 16
    x = jax.random.normal(key, (B, C, H, W), dtype=jnp.float32)

    # --- production path: zero-copy reshape (the recommended path) ---
    y0 = jax.block_until_ready(merge_channel(x, merge=True))
    assert y0.shape == (B, H, W), y0.shape
    assert jnp.array_equal(y0, jnp.squeeze(x, axis=1)), "merge mismatch (reshape)"
    z0 = jax.block_until_ready(merge_channel(y0, merge=False))
    assert z0.shape == (B, 1, H, W), z0.shape
    assert jnp.array_equal(z0, jnp.expand_dims(y0, axis=1)), "un-merge mismatch (reshape)"

    # --- Pallas HBM->HBM copy, whole-array single-DMA branch ---
    y1 = jax.block_until_ready(merge_channel(x, merge=True, use_pallas_copy=True))
    assert y1.shape == (B, H, W), y1.shape
    assert jnp.array_equal(y1, jnp.squeeze(x, axis=1)), "merge mismatch (pallas)"

    # --- Pallas copy, chunked DMA ring + remainder chunk ---
    # (10,16,16) -> 2560 elems = 20 lane-rows; 8-row chunks -> 2 full + 4-row tail.
    x2 = jax.random.normal(key, (10, 16, 16), dtype=jnp.float32)
    z2 = merge_channel(x2, merge=False, use_pallas_copy=True,
                       copy_chunk_bytes=8 * _LANE * 4)
    z2 = jax.block_until_ready(z2)
    assert z2.shape == (10, 1, 16, 16), z2.shape
    assert jnp.array_equal(z2, jnp.expand_dims(x2, axis=1)), "un-merge mismatch (pallas ring)"

    # --- Pallas copy, non-lane-aligned element count (single whole-array DMA) ---
    x3 = jax.random.normal(key, (2, 1, 5, 7), dtype=jnp.float32)
    y3 = jax.block_until_ready(merge_channel(x3, merge=True, use_pallas_copy=True))
    assert y3.shape == (2, 5, 7), y3.shape
    assert jnp.array_equal(y3, jnp.squeeze(x3, axis=1)), "merge mismatch (odd size)"

    print("KERNEL_OK")
</pallas_src>

<mosaic_0001>
module attributes {stable_mosaic.version = 11 : i64} {
  func.func @_whole_dma_copy_kernel(%arg0: memref<2x1x16x16xf32, #tpu.memory_space<any>>, %arg1: memref<2x1x16x16xf32, #tpu.memory_space<any>>, %arg2: memref<1x!tpu.dma_semaphore, #tpu.memory_space<semaphore_mem>>) attributes {dimension_semantics = [], scalar_prefetch = 0 : i64, scratch_operands = 1 : i64, tpu.core_type = #tpu.core_type<tc>} {
    %c0_i32 = arith.constant 0 : i32
    %0 = tpu.memref_slice %arg2[%c0_i32] : memref<1x!tpu.dma_semaphore, #tpu.memory_space<semaphore_mem>> -> memref<1x!tpu.dma_semaphore, #tpu.memory_space<semaphore_mem>>
    %1 = tpu.memref_squeeze %0 : memref<1x!tpu.dma_semaphore, #tpu.memory_space<semaphore_mem>> -> memref<!tpu.dma_semaphore, #tpu.memory_space<semaphore_mem>>
    tpu.enqueue_dma source(%arg0 : memref<2x1x16x16xf32, #tpu.memory_space<any>>) target(%arg1 : memref<2x1x16x16xf32, #tpu.memory_space<any>>) target_semaphore(%1 : memref<!tpu.dma_semaphore, #tpu.memory_space<semaphore_mem>>)
    %c0_i32_0 = arith.constant 0 : i32
    %2 = tpu.memref_slice %arg2[%c0_i32_0] : memref<1x!tpu.dma_semaphore, #tpu.memory_space<semaphore_mem>> -> memref<1x!tpu.dma_semaphore, #tpu.memory_space<semaphore_mem>>
    %3 = tpu.memref_squeeze %2 : memref<1x!tpu.dma_semaphore, #tpu.memory_space<semaphore_mem>> -> memref<!tpu.dma_semaphore, #tpu.memory_space<semaphore_mem>>
    tpu.wait_dma2 semaphore(%3 : memref<!tpu.dma_semaphore, #tpu.memory_space<semaphore_mem>>) src(%arg0 : memref<2x1x16x16xf32, #tpu.memory_space<any>>) dst(%arg1 : memref<2x1x16x16xf32, #tpu.memory_space<any>>)
    return
  }
}

</mosaic_0001>

<llo_original>
// kernel: tpu_custom_call.1
$region0: #{tpu_custom_call.1}
  #allocation0 [shape = 'u32[]', space=smem, size = 0x4, offset = 0x4, fixed_abs, tag = 'smem constant byte address 0x4 - core index']
  #allocation1 [shape = 'u32[144,128]{1,0:T(1,128)}', space=vmem, size = 0x12000, scoped, tag = 'internal scratch']
  #allocation2 [shape = 's32[1]{0}', space=sflag, size = 0x4, scoped, tag = 'scratch operand']
  #allocation3 [shape = 's32[]', space=sflag, size = 0x4, offset = 0, fixed_abs, tag = 'sflag constant byte address 0x0 - dummy sync flag']
  #allocation4 [shape = 'u32[0]{0}', space=smem, size = 0, offset = 0, fixed_abs, tag = 'smem constant byte address 0x0 - null']
  %s0 = inlined_call_operand.hbm [shape: f32[2,1,16,16], index: 0, kind: input, shape index: {}]
  %s1 = inlined_call_operand.hbm [shape: f32[2,1,16,16], index: 1, kind: output, shape index: {}]
  %s2 = sld [smem:[#allocation0]]
  $region2: #{tpu_custom_call.1} parent=0
    _
  %s4 = ssub.s32 1, %s2
  %s5 = scalar_select 0, %s4, %s2
  %s7 = sshll.u32 1, 14
  %s8 = sxor.u32 4294967295, %s7
  %12 = dma.general %s0, 512, %s1, [#allocation2], 131072, [#allocation4], 0, 0
  %s13 = smul.u32 2, 1
  %s14 = smul.u32 %s13, 16
  %s15 = smul.u32 %s14, 1
  %s16 = sshll.u32 %s15, 4
  %17 = dma.done [#allocation2], %s16
  %18 = vsyncmov [#allocation2]
  %s19 = vpop.sfrf %18
  %p20 = scmp.eq.s32.totalorder %s19, 0
  %p21 = pneg %p20
  %23 = shalt.err (%p21)

</llo_original>
